<compile_context>
chip_gen: v7x
topology: tpu7x:2x2x1
jax: 0.10.0
libtpu: 0.0.40
codegen_flags: <defaults>
</compile_context>

<pallas_src>
import functools

import jax
import jax.numpy as jnp
from jax.experimental import pallas as pl
from jax.experimental.pallas import tpu as pltpu


def _round_up(x: int, m: int) -> int:
    return ((x + m - 1) // m) * m


def _basenet_kernel(x_ref, w_ref, b_ref, o_ref, acc_ref):
    """One (tm, tn) output tile; grid axis 2 is the K reduction."""
    k = pl.program_id(2)

    @pl.when(k == 0)
    def _():
        acc_ref[...] = jnp.zeros_like(acc_ref)

    # MXU matmul with f32 accumulation.
    acc_ref[...] += jnp.dot(
        x_ref[...], w_ref[...], preferred_element_type=jnp.float32
    )

    # Bias add + writeback only once, on the final reduction step.
    @pl.when(k == pl.num_programs(2) - 1)
    def _():
        o_ref[...] = (acc_ref[...] + b_ref[...]).astype(o_ref.dtype)


@functools.partial(
    jax.jit, static_argnames=("compute_dtype", "tm_max", "tn_max", "tk_max")
)
def basenet_forward(
    x,
    w,
    b,
    *,
    compute_dtype=jnp.bfloat16,
    tm_max: int = 512,
    tn_max: int = 512,
    tk_max: int = 1024,
):
    """x: (B, in_features); w: (in_features, rep_dim); b: (1, rep_dim). Returns f32 (B, rep_dim)."""
    B, K = x.shape
    Kw, N = w.shape
    assert K == Kw, (K, Kw)

    # Tile sizes: largest multiples of (8, 128) that fit the problem, capped so
    # the double-buffered footprint stays well inside v7x's 32 MiB scoped VMEM.
    tm = min(tm_max, _round_up(B, 8))
    tn = min(tn_max, _round_up(N, 128))
    tk = min(tk_max, _round_up(K, 128))

    Mp = _round_up(B, tm)
    Np = _round_up(N, tn)
    Kp = _round_up(K, tk)

    # Cast for the MXU; pad to lane-dense tile multiples (zero padding on K is
    # exact for the matmul; padded N columns are sliced off afterwards).
    xc = x.astype(compute_dtype)
    wc = w.astype(compute_dtype)
    bf = b.astype(jnp.float32).reshape(1, N)
    if (Mp, Kp) != (B, K):
        xc = jnp.pad(xc, ((0, Mp - B), (0, Kp - K)))
    if (Kp, Np) != (K, N):
        wc = jnp.pad(wc, ((0, Kp - K), (0, Np - N)))
    if Np != N:
        bf = jnp.pad(bf, ((0, 0), (0, Np - N)))

    grid = (Mp // tm, Np // tn, Kp // tk)

    in_itemsize = jnp.dtype(compute_dtype).itemsize
    cost = pl.CostEstimate(
        flops=2 * Mp * Np * Kp,
        transcendentals=0,
        bytes_accessed=(Mp * Kp + Kp * Np) * in_itemsize + Np * 4 + Mp * Np * 4,
    )

    y_pad = pl.pallas_call(
        _basenet_kernel,
        out_shape=jax.ShapeDtypeStruct((Mp, Np), jnp.float32),
        grid=grid,
        in_specs=[
            pl.BlockSpec((tm, tk), lambda i, j, k: (i, k)),   # x tile
            pl.BlockSpec((tk, tn), lambda i, j, k: (k, j)),   # W tile
            pl.BlockSpec((1, tn), lambda i, j, k: (0, j)),    # bias tile (f32)
        ],
        out_specs=pl.BlockSpec((tm, tn), lambda i, j, k: (i, j)),
        scratch_shapes=[pltpu.VMEM((tm, tn), jnp.float32)],   # f32 accumulator
        compiler_params=pltpu.CompilerParams(
            # Batch / output tiles are independent -> shard across TCs (v7x);
            # K is the resident-accumulator reduction axis.
            dimension_semantics=("parallel", "parallel", "arbitrary"),
            # Explicit budget: safe on v5e/v6e (128 MiB) and v7x (64 MiB phys).
            vmem_limit_bytes=32 * 1024 * 1024,
        ),
        cost_estimate=cost,
    )(xc, wc, bf)

    return y_pad[:B, :N]


if __name__ == "__main__":
    key = jax.random.PRNGKey(0)
    kx, kw, kb, kx2, kw2, kb2 = jax.random.split(key, 6)

    # Small shapes consistent with the module: in_features -> rep_dim encoder.
    batch, in_features, rep_dim = 8, 32, 16
    x = jax.random.normal(kx, (batch, in_features), dtype=jnp.float32)
    # Deterministic synthetic parameters (not a checkpoint).
    w = jax.random.normal(kw, (in_features, rep_dim), dtype=jnp.float32) * 0.05
    b = jax.random.normal(kb, (1, rep_dim), dtype=jnp.float32) * 0.01

    y = basenet_forward(x, w, b)  # bf16 MXU path, f32 accumulate
    jax.block_until_ready(y)
    y_ref = x @ w + b
    assert y.shape == (batch, rep_dim)
    assert jnp.allclose(y, y_ref, atol=2e-2, rtol=2e-2), float(
        jnp.max(jnp.abs(y - y_ref))
    )

    # Exercise the multi-step tiled path (grid > 1 on every axis, K-loop
    # accumulation + epilogue bias add) with small tile caps, f32 compute.
    B2, K2, N2 = 16, 256, 256
    x2 = jax.random.normal(kx2, (B2, K2), dtype=jnp.float32)
    w2 = jax.random.normal(kw2, (K2, N2), dtype=jnp.float32) * 0.05
    b2 = jax.random.normal(kb2, (1, N2), dtype=jnp.float32) * 0.01
    y2 = basenet_forward(
        x2, w2, b2, compute_dtype=jnp.float32, tm_max=8, tn_max=128, tk_max=128
    )
    jax.block_until_ready(y2)
    y2_ref = x2 @ w2 + b2
    assert y2.shape == (B2, N2)
    assert jnp.allclose(y2, y2_ref, atol=2e-2, rtol=2e-2), float(
        jnp.max(jnp.abs(y2 - y2_ref))
    )

    print("KERNEL_OK")
</pallas_src>

<mosaic_0001>
module attributes {stable_mosaic.version = 11 : i64} {
  func.func @_basenet_kernel(%arg0: i32, %arg1: i32, %arg2: i32, %arg3: memref<8x128xbf16, #tpu.memory_space<vmem>>, %arg4: memref<128x128xbf16, #tpu.memory_space<vmem>>, %arg5: memref<1x128xf32, #tpu.memory_space<vmem>>, %arg6: memref<8x128xf32, #tpu.memory_space<vmem>>, %arg7: memref<8x128xf32, #tpu.memory_space<vmem>>) attributes {dimension_semantics = [#tpu.dimension_semantics<parallel>, #tpu.dimension_semantics<parallel>, #tpu.dimension_semantics<arbitrary>], iteration_bounds = array<i64: 1, 1, 1>, scalar_prefetch = 0 : i64, scratch_operands = 1 : i64, tpu.core_type = #tpu.core_type<tc>, window_params = [{transform_indices = @transform_0, window_bounds = array<i64: 8, 128>}, {transform_indices = @transform_1, window_bounds = array<i64: 128, 128>}, {transform_indices = @transform_2, window_bounds = array<i64: 1, 128>}, {transform_indices = @transform_3, window_bounds = array<i64: 8, 128>}]} {
    %c0_i32 = arith.constant 0 : i32
    %0 = arith.cmpi eq, %arg2, %c0_i32 : i32
    %1 = arith.extui %0 : i1 to i32
    %c0_i32_0 = arith.constant 0 : i32
    %2 = arith.cmpi ne, %1, %c0_i32_0 : i32
    scf.if %2 {
      %cst_10 = arith.constant 0.000000e+00 : f32
      %12 = vector.broadcast %cst_10 : f32 to vector<8x128xf32>
      %c0_11 = arith.constant 0 : index
      %c0_12 = arith.constant 0 : index
      %13 = vector.load %arg7[%c0_11, %c0_12] : memref<8x128xf32, #tpu.memory_space<vmem>>, vector<8x128xf32>
      tpu.vector_store %arg7[%c0_11, %c0_12], %12 {strides = array<i32>} : memref<8x128xf32, #tpu.memory_space<vmem>>, vector<8x128xf32>,
    } else {
    }
    %c0 = arith.constant 0 : index
    %c0_1 = arith.constant 0 : index
    %3 = vector.load %arg7[%c0, %c0_1] : memref<8x128xf32, #tpu.memory_space<vmem>>, vector<8x128xf32>
    %c0_2 = arith.constant 0 : index
    %c0_3 = arith.constant 0 : index
    %4 = vector.load %arg3[%c0_2, %c0_3] : memref<8x128xbf16, #tpu.memory_space<vmem>>, vector<8x128xbf16>
    %c0_4 = arith.constant 0 : index
    %c0_5 = arith.constant 0 : index
    %5 = vector.load %arg4[%c0_4, %c0_5] : memref<128x128xbf16, #tpu.memory_space<vmem>>, vector<128x128xbf16>
    %cst = arith.constant dense<0.000000e+00> : vector<8x128xf32>
    %6 = tpu.matmul %4, %5, %cst {dimension_numbers = #tpu.dot_dimension_numbers<[1], [0], [0], [1], [0, 0, 1, 1], [], []>} : vector<8x128xbf16>, vector<128x128xbf16>, vector<8x128xf32> -> vector<8x128xf32>
    %7 = arith.addf %3, %6 : vector<8x128xf32>
    %c0_6 = arith.constant 0 : index
    %c0_7 = arith.constant 0 : index
    %8 = vector.load %arg7[%c0_6, %c0_7] : memref<8x128xf32, #tpu.memory_space<vmem>>, vector<8x128xf32>
    tpu.vector_store %arg7[%c0_6, %c0_7], %7 {strides = array<i32>} : memref<8x128xf32, #tpu.memory_space<vmem>>, vector<8x128xf32>,
    %c0_i32_8 = arith.constant 0 : i32
    %9 = arith.cmpi eq, %arg2, %c0_i32_8 : i32
    %10 = arith.extui %9 : i1 to i32
    %c0_i32_9 = arith.constant 0 : i32
    %11 = arith.cmpi ne, %10, %c0_i32_9 : i32
    scf.if %11 {
      %c0_10 = arith.constant 0 : index
      %c0_11 = arith.constant 0 : index
      %12 = vector.load %arg7[%c0_10, %c0_11] : memref<8x128xf32, #tpu.memory_space<vmem>>, vector<8x128xf32>
      %c0_12 = arith.constant 0 : index
      %c0_13 = arith.constant 0 : index
      %13 = vector.load %arg5[%c0_12, %c0_13] : memref<1x128xf32, #tpu.memory_space<vmem>>, vector<1x128xf32>
      %14 = vector.broadcast %13 : vector<1x128xf32> to vector<8x128xf32>
      %15 = arith.addf %12, %14 : vector<8x128xf32>
      %c0_14 = arith.constant 0 : index
      %c0_15 = arith.constant 0 : index
      %16 = vector.load %arg6[%c0_14, %c0_15] : memref<8x128xf32, #tpu.memory_space<vmem>>, vector<8x128xf32>
      tpu.vector_store %arg6[%c0_14, %c0_15], %15 {strides = array<i32>} : memref<8x128xf32, #tpu.memory_space<vmem>>, vector<8x128xf32>,
    } else {
    }
    return
  }
  func.func @transform_0(%arg0: i32, %arg1: i32, %arg2: i32) -> (i32, i32) {
    %c0_i32 = arith.constant 0 : i32
    return %arg0, %arg2 : i32, i32
  }
  func.func @transform_1(%arg0: i32, %arg1: i32, %arg2: i32) -> (i32, i32) {
    %c0_i32 = arith.constant 0 : i32
    return %arg2, %arg1 : i32, i32
  }
  func.func @transform_2(%arg0: i32, %arg1: i32, %arg2: i32) -> (i32, i32) {
    %c0_i32 = arith.constant 0 : i32
    %c0_i32_0 = arith.constant 0 : i32
    return %c0_i32, %arg1 : i32, i32
  }
  func.func @transform_3(%arg0: i32, %arg1: i32, %arg2: i32) -> (i32, i32) {
    %c0_i32 = arith.constant 0 : i32
    return %arg0, %arg1 : i32, i32
  }
}

</mosaic_0001>

<llo_original>
// kernel: basenet_forward.1
$region0: #{basenet_forward.1}
  #allocation0 [shape = 'u32[]', space=smem, size = 0x4, offset = 0x4, fixed_abs, tag = 'smem constant byte address 0x4 - core index']
  #allocation1 [shape = 'u32[144,128]{1,0:T(1,128)}', space=vmem, size = 0x12000, scoped, tag = 'internal scratch']
  #allocation2 [shape = 'f32[8,128]{1,0:T(8,128)}', space=vmem, size = 0x1000, scoped, tag = 'scratch operand']
  %s0 = inlined_call_operand.vmem [shape: bf16[8,128], index: 0, kind: input, shape index: {}]
  %s1 = inlined_call_operand.vmem [shape: bf16[128,128], index: 1, kind: input, shape index: {}]
  %s2 = inlined_call_operand.vmem [shape: f32[1,128], index: 2, kind: input, shape index: {}]
  %s3 = inlined_call_operand.hbm [shape: f32[8,128], index: 3, kind: output, shape index: {}]
  %s4 = sld [smem:[#allocation0]]
  $region30: #{basenet_forward.1} parent=0
    _
  %s6 = ssub.s32 1, %s4
  %s7 = scalar_select 0, %s6, %s4
  $region1: #{basenet_forward.1} parent=0
    #allocation3 [shape = 'u8[4096]{0}', space=vmem, size = 0x1000, scoped, tag = 'output window, operand 0, single buffered']
    #allocation4 [shape = 's32[1]{0}', space=sflag, size = 0x4, scoped, tag = 'scoped memory for basenet_forward.1']
    %8 = vsyncpa [#allocation4], 0
    // Predicated region
    $region2: #{basenet_forward.1} parent=1 // pred_check
      _
    $region3: #{basenet_forward.1} parent=1 // pred_check_branch
      %10 = sbr.rel (0) target = $region5
    $region4: #{basenet_forward.1} parent=1 // pred_region
      _
    $region5: #{basenet_forward.1} parent=1 // pred_fallthru
      _
    // Predicated region
    $region6: #{basenet_forward.1} parent=1 // pred_check
      _
    $region7: #{basenet_forward.1} parent=1 // pred_check_branch
      %12 = sbr.rel (0) target = $region9
    $region8: #{basenet_forward.1} parent=1 // pred_region
      _
    $region9: #{basenet_forward.1} parent=1 // pred_fallthru
      _
    // Predicated region
    $region10: #{basenet_forward.1} parent=1 // pred_check
      _
    $region11: #{basenet_forward.1} parent=1 // pred_check_branch
      %14 = sbr.rel (0) target = $region13
    $region12: #{basenet_forward.1} parent=1 // pred_region
      _
    $region13: #{basenet_forward.1} parent=1 // pred_fallthru
      _
    %p16 = scmp.eq.s32.totalorder 0, 0
    // Predicated region
    $region14: #{basenet_forward.1} parent=1 // pred_check
      %p17 = pneg %p16
    $region15: #{basenet_forward.1} parent=1 // pred_check_branch
      %19 = sbr.rel (%p17) target = $region17
    $region16: #{basenet_forward.1} parent=1 // pred_region
      %20 = vst [vmem:[#allocation2] sm:$0xff] 0.0
    $region17: #{basenet_forward.1} parent=1 // pred_fallthru
      _
    %v21 = vld [vmem:[#allocation2] sm:$0xff]
    %v22 = vld [vmem:[%s0] sm:$0xf]
    %v23 = vld [vmem:[%s1] sm:$0xf]
    %v24 = vld [vmem:[%s1 + $0x4] sm:$0xf]
    %v25 = vld [vmem:[%s1 + $0x8] sm:$0xf]
    %v26 = vld [vmem:[%s1 + $0xc] sm:$0xf]
    %v27 = vld [vmem:[%s1 + $0x10] sm:$0xf]
    %v28 = vld [vmem:[%s1 + $0x14] sm:$0xf]
    %v29 = vld [vmem:[%s1 + $0x18] sm:$0xf]
    %v30 = vld [vmem:[%s1 + $0x1c] sm:$0xf]
    %v31 = vld [vmem:[%s1 + $0x20] sm:$0xf]
    %v32 = vld [vmem:[%s1 + $0x24] sm:$0xf]
    %v33 = vld [vmem:[%s1 + $0x28] sm:$0xf]
    %v34 = vld [vmem:[%s1 + $0x2c] sm:$0xf]
    %v35 = vld [vmem:[%s1 + $0x30] sm:$0xf]
    %v36 = vld [vmem:[%s1 + $0x34] sm:$0xf]
    %v37 = vld [vmem:[%s1 + $0x38] sm:$0xf]
    %v38 = vld [vmem:[%s1 + $0x3c] sm:$0xf]
    %v55 = vunpack.c.l.b16 %v23
    %v56 = vunpack.c.l.b16 %v24
    %v57 = vunpack.c.l.b16 %v25
    %v58 = vunpack.c.l.b16 %v26
    %v59 = vunpack.c.l.b16 %v27
    %v60 = vunpack.c.l.b16 %v28
    %v61 = vunpack.c.l.b16 %v29
    %v62 = vunpack.c.l.b16 %v30
    %v63 = vunpack.c.l.b16 %v31
    %v64 = vunpack.c.l.b16 %v32
    %v65 = vunpack.c.l.b16 %v33
    %v66 = vunpack.c.l.b16 %v34
    %v67 = vunpack.c.l.b16 %v35
    %v68 = vunpack.c.l.b16 %v36
    %v69 = vunpack.c.l.b16 %v37
    %v70 = vunpack.c.l.b16 %v38
    %v71 = vpack.c.b16 %v56, %v55
    %v72 = vpack.c.b16 %v58, %v57
    %v73 = vpack.c.b16 %v60, %v59
    %v74 = vpack.c.b16 %v62, %v61
    %v75 = vpack.c.b16 %v64, %v63
    %v76 = vpack.c.b16 %v66, %v65
    %v77 = vpack.c.b16 %v68, %v67
    %v78 = vpack.c.b16 %v70, %v69
    %87 = vmatprep.subr.bf16.mxu0 0
    %88 = vmatpush1.bf16.msra.mxu0 %v71
    %89 = vmatprep.subr.bf16.mxu0 0
    %90 = vmatpush1.bf16.msra.mxu0 %v72
    %91 = vmatprep.subr.bf16.mxu0 0
    %92 = vmatpush1.bf16.msra.mxu0 %v73
    %93 = vmatprep.subr.bf16.mxu0 0
    %94 = vmatpush1.bf16.msra.mxu0 %v74
    %95 = vmatprep.subr.bf16.mxu0 0
    %96 = vmatpush1.bf16.msra.mxu0 %v75
    %97 = vmatprep.subr.bf16.mxu0 0
    %98 = vmatpush1.bf16.msra.mxu0 %v76
    %99 = vmatprep.subr.bf16.mxu0 0
    %100 = vmatpush1.bf16.msra.mxu0 %v77
    %101 = vmatprep.subr.bf16.mxu0 0
    %102 = vmatpush1.bf16.msra.mxu0 %v78
    %103 = vmatprep.subr.bf16.mxu0 0
    %104 = vmatpush1.bf16.msra.mxu0 0
    %105 = vmatprep.subr.bf16.mxu0 0
    %106 = vmatpush1.bf16.msra.mxu0 0
    %107 = vmatprep.subr.bf16.mxu0 0
    %108 = vmatpush1.bf16.msra.mxu0 0
    %109 = vmatprep.subr.bf16.mxu0 0
    %110 = vmatpush1.bf16.msra.mxu0 0
    %111 = vmatprep.subr.bf16.mxu0 0
    %112 = vmatpush1.bf16.msra.mxu0 0
    %113 = vmatprep.subr.bf16.mxu0 0
    %114 = vmatpush1.bf16.msra.mxu0 0
    %115 = vmatprep.subr.bf16.mxu0 0
    %116 = vmatpush1.bf16.msra.mxu0 0
    %117 = vmatprep.subr.bf16.mxu0 0
    %118 = vmatpush1.bf16.msra.mxu0 0
    %119 = vmatprep.mubr.bf16.mxu0 0
    %120 = vmatmul.mubr.bf16.gmra.mrb[0].mxu0 %v22
    %v121 = vpop.f32.mrb[0].mxu0
    %v122 = vadd.f32 0.0, %v121
    %v123 = vpop.f32.mrb[0].mxu0
    %v124 = vpop.f32.mrb[0].mxu0
    %v125 = vpop.f32.mrb[0].mxu0
    %126 = vdwg.mxu0
    %v127 = vadd.f32 %v21, %v122
    %128 = vst [vmem:[#allocation2] sm:$0xff] %v127
    // Predicated region
    $region18: #{basenet_forward.1} parent=1 // pred_check
      %p129 = pneg %p16
    $region19: #{basenet_forward.1} parent=1 // pred_check_branch
      %131 = sbr.rel (%p129) target = $region21
    $region20: #{basenet_forward.1} parent=1 // pred_region
      %v132 = vld [vmem:[#allocation2] sm:$0xff]
      %v133 = vld [vmem:[%s2] sm:$0x1]
      %v135 = vlaneseq
      %v136 = vshrl.u32 %v135, 7
      %v137 = vsub.s32 0, %v136
      %v138 = vrot.slane %v133, %v137
      %v140 = vadd.f32 %v132, %v138
      %141 = vst [vmem:[#allocation3] sm:$0xff] %v140
    $region21: #{basenet_forward.1} parent=1 // pred_fallthru
      _
    // Predicated region
    $region22: #{basenet_forward.1} parent=1 // pred_check
      _
    $region23: #{basenet_forward.1} parent=1 // pred_check_branch
      %143 = sbr.rel (0) target = $region25
    $region24: #{basenet_forward.1} parent=1 // pred_region
      %s145 = ssub.s32 128, 128
      %146 = vsyncadd [#allocation4], %s145
      %s148 = sshll.u32 [#allocation3], 4
      %s149 = int_to_ptr.vmem [resolvable:$true] %s148
      %151 = dma.vmem_to_hbm [thread:$0]  %s149, 128, %s3, [#allocation4]
    $region25: #{basenet_forward.1} parent=1 // pred_fallthru
      _
    // Predicated region
    $region26: #{basenet_forward.1} parent=1 // pred_check
      _
    $region27: #{basenet_forward.1} parent=1 // pred_check_branch
      %153 = sbr.rel (0) target = $region29
    $region28: #{basenet_forward.1} parent=1 // pred_region
      %154 = dma.done [#allocation4], 128
    $region29: #{basenet_forward.1} parent=1 // pred_fallthru
      _
    %155 = vsyncpa [#allocation4], 1

</llo_original>
